<compile_context>
chip_gen: v7x
topology: tpu7x:2x2x1
jax: 0.10.0
libtpu: 0.0.40
codegen_flags: <defaults>
</compile_context>

<pallas_src>
import jax
import jax.numpy as jnp
from jax.experimental import pallas as pl
from jax.experimental.pallas import tpu as pltpu


def _loss_match_kernel(e_ref, w_ref, o_ref):
    """One grid step processes TB batch elements.

    e_ref : VMEM [TB, K, D]  embeddings (source dtype, upcast here)
    w_ref : VMEM [TB, 1, D]  pre-gathered W column per batch element
    o_ref : VMEM [1, 1, D]   per-block partial sums (f32, lane-dense)
    """
    e = e_ref[...].astype(jnp.float32)          # (TB, K, D)
    w = w_ref[...].astype(jnp.float32)          # (TB, 1, D)
    diff = jnp.abs(e - w)                       # broadcast over K -> (TB, K, D), pure VPU
    # Reduce only the leading (non-lane) axes: vreg-to-vreg adds. The single
    # cross-lane reduce happens once, in the wrapper, over G*D elements.
    o_ref[...] = jnp.sum(diff, axis=1, keepdims=True).sum(axis=0, keepdims=True)


def _pick_batch_tile(B, K, D, itemsize, target_bytes=2 << 20):
    """Largest divisor of B whose (TB, K, D) e-block stays under ~2 MiB."""
    cap = max(1, target_bytes // max(1, K * D * itemsize))
    tb = min(B, cap)
    while B % tb != 0:
        tb -= 1
    return tb


def loss_match(e_vectors, W, i, match_weight=80.0):
    """Pallas implementation of LossMatch.forward.

    e_vectors : [B, K, D, 1] (or [B, K, D]), any float dtype
    W         : [D, N]
    i         : int[B]  (column index into W per batch element)
    match_weight must be a static Python scalar.
    Returns scalar f32 loss.
    """
    B, K = e_vectors.shape[0], e_vectors.shape[1]
    D, N = W.shape

    # Keep the HBM dtype — no wrapper-side f32 cast of the big tensor.
    e = e_vectors.reshape(B, K, D)
    idx = i.astype(jnp.int32)
    # Gather only the B needed columns, then transpose the small (D, B) result.
    w_g = jnp.take(W, idx, axis=1).T.reshape(B, 1, D)      # (B, 1, D), W's dtype

    tb = _pick_batch_tile(B, K, D, jnp.dtype(e.dtype).itemsize)
    G = B // tb

    partials = pl.pallas_call(
        _loss_match_kernel,
        out_shape=jax.ShapeDtypeStruct((G, 1, D), jnp.float32),
        grid=(G,),
        in_specs=[
            # (TB, K, D): last two dims equal the full array dims -> always legal.
            pl.BlockSpec((tb, K, D), lambda g: (g, 0, 0)),
            pl.BlockSpec((tb, 1, D), lambda g: (g, 0, 0)),
        ],
        out_specs=pl.BlockSpec((1, 1, D), lambda g: (g, 0, 0)),
        compiler_params=pltpu.CompilerParams(
            dimension_semantics=("parallel",),   # independent blocks: megacore-safe
        ),
    )(e, w_g)

    scale = float(match_weight) / float(B * K * D)
    return jnp.sum(partials) * scale


def loss_match_ref(e_vectors, W, i, match_weight=80.0):
    """Pure-JAX reference mirroring the PyTorch loop."""
    B, K = e_vectors.shape[0], e_vectors.shape[1]
    D = W.shape[0]
    e = e_vectors.reshape(B, K, D).astype(jnp.float32)
    w_cols = jnp.transpose(W)[i].astype(jnp.float32)             # (B, D)
    per_bk = jnp.mean(jnp.abs(e - w_cols[:, None, :]), axis=-1)  # (B, K)
    per_b = jnp.sum(per_bk, axis=-1) / K                         # (B,)
    return jnp.mean(per_b) * match_weight


if __name__ == "__main__":
    key = jax.random.PRNGKey(0)
    k1, k2, k3 = jax.random.split(key, 3)

    B, K, D, N = 2, 8, 128, 16
    e_vectors = jax.random.normal(k1, (B, K, D, 1), dtype=jnp.float32)
    W = jax.random.normal(k2, (D, N), dtype=jnp.float32)
    i = jax.random.randint(k3, (B,), 0, N, dtype=jnp.int32)

    out = loss_match(e_vectors, W, i)
    out = jax.block_until_ready(out)

    ref = jax.block_until_ready(loss_match_ref(e_vectors, W, i))
    assert jnp.allclose(out, ref, rtol=1e-5, atol=1e-5), (out, ref)

    print("KERNEL_OK")
</pallas_src>

<mosaic_0001>
module attributes {stable_mosaic.version = 11 : i64} {
  func.func @_loss_match_kernel(%arg0: i32, %arg1: memref<2x8x128xf32, #tpu.memory_space<vmem>>, %arg2: memref<2x1x128xf32, #tpu.memory_space<vmem>>, %arg3: memref<1x1x128xf32, #tpu.memory_space<vmem>>) attributes {dimension_semantics = [#tpu.dimension_semantics<parallel>], iteration_bounds = array<i64: 1>, scalar_prefetch = 0 : i64, scratch_operands = 0 : i64, tpu.core_type = #tpu.core_type<tc>, window_params = [{transform_indices = @transform_0, window_bounds = array<i64: 2, 8, 128>}, {transform_indices = @transform_1, window_bounds = array<i64: 2, 1, 128>}, {transform_indices = @transform_2, window_bounds = array<i64: 1, 1, 128>}]} {
    %c0 = arith.constant 0 : index
    %c0_0 = arith.constant 0 : index
    %c0_1 = arith.constant 0 : index
    %0 = vector.load %arg1[%c0, %c0_0, %c0_1] : memref<2x8x128xf32, #tpu.memory_space<vmem>>, vector<2x8x128xf32>
    %c0_2 = arith.constant 0 : index
    %c0_3 = arith.constant 0 : index
    %c0_4 = arith.constant 0 : index
    %1 = vector.load %arg2[%c0_2, %c0_3, %c0_4] : memref<2x1x128xf32, #tpu.memory_space<vmem>>, vector<2x1x128xf32>
    %2 = vector.broadcast %1 : vector<2x1x128xf32> to vector<2x8x128xf32>
    %3 = arith.subf %0, %2 : vector<2x8x128xf32>
    %4 = math.absf %3 : vector<2x8x128xf32>
    %cst = arith.constant dense<0.000000e+00> : vector<2x128xf32>
    %5 = vector.multi_reduction <add>, %4, %cst [1] : vector<2x8x128xf32> to vector<2x128xf32>
    %6 = vector.shape_cast %5 : vector<2x128xf32> to vector<2x1x128xf32>
    %cst_5 = arith.constant dense<0.000000e+00> : vector<1x128xf32>
    %7 = vector.multi_reduction <add>, %6, %cst_5 [0] : vector<2x1x128xf32> to vector<1x128xf32>
    %8 = vector.shape_cast %7 : vector<1x128xf32> to vector<1x1x128xf32>
    %c0_6 = arith.constant 0 : index
    %c0_7 = arith.constant 0 : index
    %c0_8 = arith.constant 0 : index
    %9 = vector.load %arg3[%c0_6, %c0_7, %c0_8] : memref<1x1x128xf32, #tpu.memory_space<vmem>>, vector<1x1x128xf32>
    tpu.vector_store %arg3[%c0_6, %c0_7, %c0_8], %8 {strides = array<i32>} : memref<1x1x128xf32, #tpu.memory_space<vmem>>, vector<1x1x128xf32>,
    return
  }
  func.func @transform_0(%arg0: i32) -> (i32, i32, i32) {
    %c0_i32 = arith.constant 0 : i32
    %c0_i32_0 = arith.constant 0 : i32
    %c0_i32_1 = arith.constant 0 : i32
    return %arg0, %c0_i32, %c0_i32_0 : i32, i32, i32
  }
  func.func @transform_1(%arg0: i32) -> (i32, i32, i32) {
    %c0_i32 = arith.constant 0 : i32
    %c0_i32_0 = arith.constant 0 : i32
    %c0_i32_1 = arith.constant 0 : i32
    return %arg0, %c0_i32, %c0_i32_0 : i32, i32, i32
  }
  func.func @transform_2(%arg0: i32) -> (i32, i32, i32) {
    %c0_i32 = arith.constant 0 : i32
    %c0_i32_0 = arith.constant 0 : i32
    %c0_i32_1 = arith.constant 0 : i32
    return %arg0, %c0_i32, %c0_i32_0 : i32, i32, i32
  }
}

</mosaic_0001>

<llo_original>
// kernel: tpu_custom_call.1
$region0: #{tpu_custom_call.1}
  #allocation0 [shape = 'u32[]', space=smem, size = 0x4, offset = 0x4, fixed_abs, tag = 'smem constant byte address 0x4 - core index']
  #allocation1 [shape = 'u32[144,128]{1,0:T(1,128)}', space=vmem, size = 0x12000, scoped, tag = 'internal scratch']
  %s0 = inlined_call_operand.hbm [shape: f32[2,8,128], index: 0, kind: input, shape index: {}]
  %s1 = inlined_call_operand.vmem [shape: f32[2,1,128], index: 1, kind: input, shape index: {}]
  %s2 = inlined_call_operand.hbm [shape: f32[1,1,128], index: 2, kind: output, shape index: {}]
  %s3 = sld [smem:[#allocation0]]
  $region22: #{tpu_custom_call.1} parent=0
    _
  %s5 = ssub.s32 1, %s3
  %s6 = scalar_select 0, %s5, %s3
  $region1: #{tpu_custom_call.1} parent=0
    #allocation2 [shape = 'u8[8192]{0}', space=vmem, size = 0x2000, scoped, tag = 'input window, operand 0, single buffered']
    #allocation3 [shape = 's32[1]{0}', space=sflag, size = 0x4, scoped, tag = 'scoped memory for tpu_custom_call.1']
    #allocation4 [shape = 's32[1]{0}', space=sflag, size = 0x4, scoped, tag = 'scoped memory for tpu_custom_call.1']
    #allocation5 [shape = 'u8[512]{0}', space=vmem, size = 0x400, scoped, tag = 'output window, operand 0, single buffered']
    %7 = vsyncpa [#allocation3], 0
    %8 = vsyncpa [#allocation4], 0
    // Predicated region
    $region2: #{tpu_custom_call.1} parent=1 // pred_check
      _
    $region3: #{tpu_custom_call.1} parent=1 // pred_check_branch
      %10 = sbr.rel (0) target = $region5
    $region4: #{tpu_custom_call.1} parent=1 // pred_region
      %s12 = ssub.s32 256, 256
      %13 = vsyncadd [#allocation3], %s12
      %s14 = sshll.u32 [#allocation2], 4
      %s15 = int_to_ptr.vmem [resolvable:$true] %s14
      %20 = dma.hbm_to_vmem [thread:$0]  %s0, 256, %s15, [#allocation3], 128, 128, 8
    $region5: #{tpu_custom_call.1} parent=1 // pred_fallthru
      _
    // Predicated region
    $region6: #{tpu_custom_call.1} parent=1 // pred_check
      _
    $region7: #{tpu_custom_call.1} parent=1 // pred_check_branch
      %22 = sbr.rel (0) target = $region9
    $region8: #{tpu_custom_call.1} parent=1 // pred_region
      _
    $region9: #{tpu_custom_call.1} parent=1 // pred_fallthru
      _
    // Predicated region
    $region10: #{tpu_custom_call.1} parent=1 // pred_check
      _
    $region11: #{tpu_custom_call.1} parent=1 // pred_check_branch
      %24 = sbr.rel (0) target = $region13
    $region12: #{tpu_custom_call.1} parent=1 // pred_region
      %25 = dma.done [#allocation3], 256
    $region13: #{tpu_custom_call.1} parent=1 // pred_fallthru
      _
    %v26 = vld [vmem:[#allocation2] sm:$0xff]
    %v27 = vld [vmem:[#allocation2 + $0x8] sm:$0xff]
    %v28 = vld [vmem:[%s1] sm:$0x1]
    %v29 = vld [vmem:[%s1 + $0x1] sm:$0x1]
    %v32 = vlaneseq
    %v33 = vshrl.u32 %v32, 7
    %v34 = vsub.s32 0, %v33
    %v35 = vrot.slane %v28, %v34
    %v36 = vlaneseq
    %v37 = vshrl.u32 %v36, 7
    %v38 = vsub.s32 0, %v37
    %v39 = vrot.slane %v29, %v38
    %v42 = vsub.f32 %v26, %v35
    %v43 = vsub.f32 %v27, %v39
    %v44 = vand.u32 2147483647, %v42
    %v45 = vand.u32 2147483647, %v43
    %v46 = vrot.slane %v44, 4
    %v47 = vadd.f32 %v44, %v46
    %v48 = vrot.slane %v47, 2
    %v49 = vadd.f32 %v47, %v48
    %v50 = vrot.slane %v49, 1
    %v51 = vadd.f32 %v49, %v50
    %v52 = vrot.slane %v45, 4
    %v53 = vadd.f32 %v45, %v52
    %v54 = vrot.slane %v53, 2
    %v55 = vadd.f32 %v53, %v54
    %v56 = vrot.slane %v55, 1
    %v57 = vadd.f32 %v55, %v56
    %v58 = vadd.f32 %v51, %v57
    %59 = vst [vmem:[#allocation5] sm:$0x1] %v58
    // Predicated region
    $region14: #{tpu_custom_call.1} parent=1 // pred_check
      _
    $region15: #{tpu_custom_call.1} parent=1 // pred_check_branch
      %61 = sbr.rel (0) target = $region17
    $region16: #{tpu_custom_call.1} parent=1 // pred_region
      %s63 = ssub.s32 16, 16
      %64 = vsyncadd [#allocation4], %s63
      %s66 = sshll.u32 [#allocation5], 4
      %s67 = int_to_ptr.vmem [resolvable:$true] %s66
      %69 = dma.vmem_to_hbm [thread:$0]  %s67, 16, %s2, [#allocation4]
    $region17: #{tpu_custom_call.1} parent=1 // pred_fallthru
      _
    // Predicated region
    $region18: #{tpu_custom_call.1} parent=1 // pred_check
      _
    $region19: #{tpu_custom_call.1} parent=1 // pred_check_branch
      %71 = sbr.rel (0) target = $region21
    $region20: #{tpu_custom_call.1} parent=1 // pred_region
      %72 = dma.done [#allocation4], 16
    $region21: #{tpu_custom_call.1} parent=1 // pred_fallthru
      _
    %73 = vsyncpa [#allocation3], 1
    %74 = vsyncpa [#allocation4], 1

</llo_original>
